<compile_context>
chip_gen: v7x
topology: tpu7x:2x2x1
jax: 0.10.0
libtpu: 0.0.40
codegen_flags: <defaults>
</compile_context>

<pallas_src>
import functools

import jax
import jax.numpy as jnp
from jax import lax
from jax.experimental import pallas as pl
from jax.experimental.pallas import tpu as pltpu

NEURONS_PER_LAYER_DISCRIMINATOR = 256
BN_EPS = 0.8  # BatchNorm1d(256, 0.8) -> eps = 0.8


def _default_epilogue_dtype():
    """bf16 scale/shift/LeakyReLU only where the VPU has native bf16 (v6e/v7x)."""
    try:
        kind = jax.devices()[0].device_kind.lower()
    except Exception:
        return jnp.float32
    if "v6" in kind or "v7" in kind:
        return jnp.bfloat16
    return jnp.float32


def _vmem_limit_bytes():
    """~75% of physical VMEM (96 MiB on v5e/v6e, 48 MiB on v7x)."""
    try:
        return int(0.75 * pltpu.get_tpu_info().vmem_capacity_bytes)
    except Exception:
        return 32 * 1024 * 1024


def discriminator_kernel(xa_ref, xb_ref, mask_ref,
                         w1_ref, g1_ref, b1_ref,
                         w2_ref, g2_ref, b2_ref,
                         w3_ref, g3_ref, b3_ref,
                         w4_ref,
                         o_ref,
                         *, inv_count, apply_mask, compute_dtype):
    """Whole MLP on-chip (single ungridded call; everything fits in VMEM)."""

    def bn_lrelu(z, g_ref, b_ref, out_dtype):
        # Training-mode BatchNorm1d folded to one scale/shift, then LeakyReLU(0.2).
        # Statistics in f32; padded rows (if any) masked out of the sums.
        if apply_mask:
            zm = z * mask_ref[...]                       # zero out padded rows
            s1 = jnp.sum(zm, axis=0, keepdims=True)      # sum(z)   over valid rows
            s2 = jnp.sum(zm * z, axis=0, keepdims=True)  # sum(z^2) over valid rows
        else:
            s1 = jnp.sum(z, axis=0, keepdims=True)
            s2 = jnp.sum(z * z, axis=0, keepdims=True)
        mean = s1 * inv_count                            # (1, 256)
        # One-pass variance; clamp >= 0 (safe anyway since eps = 0.8 dominates).
        var = jnp.maximum(s2 * inv_count - mean * mean, 0.0)
        scale = g_ref[...] * lax.rsqrt(var + BN_EPS)     # (1, 256)
        shift = b_ref[...] - mean * scale                # (1, 256)
        # Scale/shift + LeakyReLU in compute_dtype (bf16 on v6e/v7x, f32 on v5e).
        zc = z.astype(compute_dtype)
        zn = zc * scale.astype(compute_dtype) + shift.astype(compute_dtype)
        h = jnp.maximum(zn, zn * 0.2)                    # LeakyReLU(0.2), one vmax
        return h.astype(out_dtype)                       # no-op when dtypes match

    # Layer 1: in-VMEM concat of the two keypoint halves, single K=2*d_half dot.
    x = jnp.concatenate([xa_ref[...], xb_ref[...]], axis=-1).astype(jnp.bfloat16)
    z1 = jnp.dot(x, w1_ref[...], preferred_element_type=jnp.float32)
    h1 = bn_lrelu(z1, g1_ref, b1_ref, jnp.bfloat16)      # bf16 straight into MXU

    z2 = jnp.dot(h1, w2_ref[...], preferred_element_type=jnp.float32)
    h2 = bn_lrelu(z2, g2_ref, b2_ref, jnp.bfloat16)

    z3 = jnp.dot(h2, w3_ref[...], preferred_element_type=jnp.float32)
    h3 = bn_lrelu(z3, g3_ref, b3_ref, jnp.float32)

    # 256 -> 1 head as a lane reduction (avoids a 1-lane MXU matmul), then move
    # the batch onto the lane axis so the sigmoid + store are lane-dense.
    logits = jnp.sum(h3 * w4_ref[...], axis=-1)          # (B_pad,) f32
    logits = logits.reshape(1, -1)                       # (1, B_pad)

    # Exact sigmoid (no approx reciprocal); exp + divide sit on the idle EUP.
    o_ref[...] = 1.0 / (1.0 + jnp.exp(-logits))


def discriminator_forward(kp_cropped, kp_original, params, *, epilogue_dtype=None):
    """kp_cropped, kp_original: (B, 2*numJoints) f32.  Returns (B, 1) f32."""
    B, d_half = kp_cropped.shape
    assert kp_original.shape == (B, d_half)
    H = NEURONS_PER_LAYER_DISCRIMINATOR
    assert params["w1"].shape == (2 * d_half, H)

    if epilogue_dtype is None:
        epilogue_dtype = _default_epilogue_dtype()

    # Pad the batch to a sublane multiple; padded rows are masked out of the
    # BatchNorm statistics inside the kernel (full-batch semantics preserved).
    B_pad = -(-B // 8) * 8
    apply_mask = B_pad != B
    if apply_mask:
        pad = ((0, B_pad - B), (0, 0))
        kp_cropped = jnp.pad(kp_cropped, pad)
        kp_original = jnp.pad(kp_original, pad)
        mask = (jnp.arange(B_pad) < B).astype(jnp.float32)[:, None]   # (B_pad, 1)
    else:
        mask = jnp.ones((B_pad, 1), jnp.float32)                      # unused

    kernel = functools.partial(
        discriminator_kernel,
        inv_count=1.0 / float(B),
        apply_mask=apply_mask,
        compute_dtype=epilogue_dtype,
    )

    args = (kp_cropped, kp_original, mask,
            params["w1"], params["g1"], params["b1"],
            params["w2"], params["g2"], params["b2"],
            params["w3"], params["g3"], params["b3"],
            params["w4"])

    # Advisory cost estimate so XLA can schedule/overlap this small call.
    flops = 2 * B_pad * (2 * d_half * H + 2 * H * H + H) + 8 * 3 * B_pad * H
    transcendentals = 3 * H + B_pad                      # rsqrt per layer + sigmoid exp
    bytes_accessed = int(sum(a.size * a.dtype.itemsize for a in args)) + B_pad * 4

    out = pl.pallas_call(
        kernel,
        out_shape=jax.ShapeDtypeStruct((1, B_pad), jnp.float32),
        in_specs=[pl.BlockSpec(memory_space=pltpu.VMEM) for _ in args],
        out_specs=pl.BlockSpec(memory_space=pltpu.VMEM),
        compiler_params=pltpu.CompilerParams(vmem_limit_bytes=_vmem_limit_bytes()),
        cost_estimate=pl.CostEstimate(flops=int(flops),
                                      transcendentals=int(transcendentals),
                                      bytes_accessed=bytes_accessed),
    )(*args)

    # Lane-dense (1, B_pad) -> module layout (B, 1).
    return out[0, :B].reshape(B, 1)


def init_params(key, num_joints):
    """Deterministic synthetic parameters with the module's shapes.

    Linear weights stored pre-transposed (in, out) in bf16; w1 holds the
    stacked [cropped; original] input halves.  BN params and the head row
    stay f32.
    """
    image_size = num_joints * 2              # per-input feature count
    H = NEURONS_PER_LAYER_DISCRIMINATOR
    ks = jax.random.split(key, 4)

    def lin(k, fan_in, fan_out):
        bound = 1.0 / jnp.sqrt(fan_in)
        return jax.random.uniform(k, (fan_in, fan_out), jnp.float32, -bound, bound)

    params = {
        "w1": lin(ks[0], 2 * image_size, H).astype(jnp.bfloat16),
        "g1": jnp.ones((1, H), jnp.float32), "b1": jnp.zeros((1, H), jnp.float32),
        "w2": lin(ks[1], H, H).astype(jnp.bfloat16),
        "g2": jnp.ones((1, H), jnp.float32), "b2": jnp.zeros((1, H), jnp.float32),
        "w3": lin(ks[2], H, H).astype(jnp.bfloat16),
        "g3": jnp.ones((1, H), jnp.float32), "b3": jnp.zeros((1, H), jnp.float32),
        # Head weight as a (1, 256) row (== PyTorch Linear(256, 1).weight shape).
        "w4": lin(ks[3], H, 1).T.astype(jnp.float32),
    }
    return params


def discriminator_reference(kp_cropped, kp_original, params):
    """Pure-JAX f32 reference (module semantics) for correctness checking."""
    x = jnp.concatenate([kp_cropped, kp_original], axis=-1).astype(jnp.float32)

    def block(h, w, g, b):
        z = h @ w.astype(jnp.float32)
        mean = jnp.mean(z, axis=0, keepdims=True)
        var = jnp.mean((z - mean) ** 2, axis=0, keepdims=True)
        zn = (z - mean) / jnp.sqrt(var + BN_EPS) * g + b
        return jnp.where(zn > 0, zn, 0.2 * zn)

    h = block(x, params["w1"], params["g1"], params["b1"])
    h = block(h, params["w2"], params["g2"], params["b2"])
    h = block(h, params["w3"], params["g3"], params["b3"])
    logits = jnp.sum(h * params["w4"], axis=-1, keepdims=True)
    return jax.nn.sigmoid(logits)


if __name__ == "__main__":
    num_joints = 8            # image_size = 16, concat input dim = 32
    key = jax.random.PRNGKey(0)
    k_p, k_a, k_b, k_c, k_d = jax.random.split(key, 5)
    params = init_params(k_p, num_joints)

    # Sublane-aligned batch (mask-free fast path).
    B1 = 16
    xa = jax.random.normal(k_a, (B1, num_joints * 2), jnp.float32)
    xb = jax.random.normal(k_b, (B1, num_joints * 2), jnp.float32)
    out = jax.block_until_ready(discriminator_forward(xa, xb, params))
    ref = discriminator_reference(xa, xb, params)
    assert out.shape == (B1, 1), out.shape
    # bf16 matmul operands; sigmoid is exact now -> tolerance tightened to 1e-2.
    assert jnp.allclose(out, ref, atol=1e-2, rtol=0.0), (out, ref)

    # Ragged batch (B % 8 != 0): padded rows are masked out of the BN statistics.
    B2 = 5
    xa2 = jax.random.normal(k_c, (B2, num_joints * 2), jnp.float32)
    xb2 = jax.random.normal(k_d, (B2, num_joints * 2), jnp.float32)
    out2 = jax.block_until_ready(discriminator_forward(xa2, xb2, params))
    ref2 = discriminator_reference(xa2, xb2, params)
    assert out2.shape == (B2, 1), out2.shape
    assert jnp.allclose(out2, ref2, atol=1e-2, rtol=0.0), (out2, ref2)

    print("KERNEL_OK")
</pallas_src>

<mosaic_0001>
module attributes {stable_mosaic.version = 11 : i64} {
  func.func @discriminator_kernel(%arg0: memref<16x16xf32, #tpu.memory_space<vmem>>, %arg1: memref<16x16xf32, #tpu.memory_space<vmem>>, %arg2: memref<16x1xf32, #tpu.memory_space<vmem>>, %arg3: memref<32x256xbf16, #tpu.memory_space<vmem>>, %arg4: memref<1x256xf32, #tpu.memory_space<vmem>>, %arg5: memref<1x256xf32, #tpu.memory_space<vmem>>, %arg6: memref<256x256xbf16, #tpu.memory_space<vmem>>, %arg7: memref<1x256xf32, #tpu.memory_space<vmem>>, %arg8: memref<1x256xf32, #tpu.memory_space<vmem>>, %arg9: memref<256x256xbf16, #tpu.memory_space<vmem>>, %arg10: memref<1x256xf32, #tpu.memory_space<vmem>>, %arg11: memref<1x256xf32, #tpu.memory_space<vmem>>, %arg12: memref<1x256xf32, #tpu.memory_space<vmem>>, %arg13: memref<1x16xf32, #tpu.memory_space<vmem>>) attributes {dimension_semantics = [], scalar_prefetch = 0 : i64, scratch_operands = 0 : i64, tpu.core_type = #tpu.core_type<tc>} {
    %c0 = arith.constant 0 : index
    %c0_0 = arith.constant 0 : index
    %0 = vector.load %arg0[%c0, %c0_0] : memref<16x16xf32, #tpu.memory_space<vmem>>, vector<16x16xf32>
    %c0_1 = arith.constant 0 : index
    %c0_2 = arith.constant 0 : index
    %1 = vector.load %arg1[%c0_1, %c0_2] : memref<16x16xf32, #tpu.memory_space<vmem>>, vector<16x16xf32>
    %2 = tpu.concatenate %0, %1 in 1 : vector<16x16xf32>, vector<16x16xf32> -> vector<16x32xf32>
    %3 = arith.truncf %2 : vector<16x32xf32> to vector<16x32xbf16>
    %c0_3 = arith.constant 0 : index
    %c0_4 = arith.constant 0 : index
    %4 = vector.load %arg3[%c0_3, %c0_4] : memref<32x256xbf16, #tpu.memory_space<vmem>>, vector<32x256xbf16>
    %cst = arith.constant dense<0.000000e+00> : vector<16x256xf32>
    %5 = tpu.matmul %3, %4, %cst {dimension_numbers = #tpu.dot_dimension_numbers<[1], [0], [0], [1], [0, 0, 1, 1], [], []>} : vector<16x32xbf16>, vector<32x256xbf16>, vector<16x256xf32> -> vector<16x256xf32>
    %cst_5 = arith.constant dense<0.000000e+00> : vector<256xf32>
    %6 = vector.multi_reduction <add>, %5, %cst_5 [0] : vector<16x256xf32> to vector<256xf32>
    %7 = vector.shape_cast %6 : vector<256xf32> to vector<1x256xf32>
    %8 = arith.mulf %5, %5 : vector<16x256xf32>
    %cst_6 = arith.constant dense<0.000000e+00> : vector<256xf32>
    %9 = vector.multi_reduction <add>, %8, %cst_6 [0] : vector<16x256xf32> to vector<256xf32>
    %10 = vector.shape_cast %9 : vector<256xf32> to vector<1x256xf32>
    %cst_7 = arith.constant 6.250000e-02 : f32
    %11 = vector.broadcast %cst_7 : f32 to vector<1x256xf32>
    %12 = arith.mulf %7, %11 : vector<1x256xf32>
    %cst_8 = arith.constant 6.250000e-02 : f32
    %13 = vector.broadcast %cst_8 : f32 to vector<1x256xf32>
    %14 = arith.mulf %10, %13 : vector<1x256xf32>
    %15 = arith.mulf %12, %12 : vector<1x256xf32>
    %16 = arith.subf %14, %15 : vector<1x256xf32>
    %cst_9 = arith.constant 0.000000e+00 : f32
    %17 = vector.broadcast %cst_9 : f32 to vector<1x256xf32>
    %18 = arith.maximumf %16, %17 : vector<1x256xf32>
    %c0_10 = arith.constant 0 : index
    %c0_11 = arith.constant 0 : index
    %19 = vector.load %arg4[%c0_10, %c0_11] : memref<1x256xf32, #tpu.memory_space<vmem>>, vector<1x256xf32>
    %cst_12 = arith.constant 8.000000e-01 : f32
    %20 = vector.broadcast %cst_12 : f32 to vector<1x256xf32>
    %21 = arith.addf %18, %20 : vector<1x256xf32>
    %22 = math.rsqrt %21 : vector<1x256xf32>
    %23 = arith.mulf %19, %22 : vector<1x256xf32>
    %c0_13 = arith.constant 0 : index
    %c0_14 = arith.constant 0 : index
    %24 = vector.load %arg5[%c0_13, %c0_14] : memref<1x256xf32, #tpu.memory_space<vmem>>, vector<1x256xf32>
    %25 = arith.mulf %12, %23 : vector<1x256xf32>
    %26 = arith.subf %24, %25 : vector<1x256xf32>
    %27 = vector.broadcast %23 : vector<1x256xf32> to vector<16x256xf32>
    %28 = arith.mulf %5, %27 : vector<16x256xf32>
    %29 = vector.broadcast %26 : vector<1x256xf32> to vector<16x256xf32>
    %30 = arith.addf %28, %29 : vector<16x256xf32>
    %cst_15 = arith.constant 2.000000e-01 : f32
    %31 = vector.broadcast %cst_15 : f32 to vector<16x256xf32>
    %32 = arith.mulf %30, %31 : vector<16x256xf32>
    %33 = arith.maximumf %30, %32 : vector<16x256xf32>
    %34 = arith.truncf %33 : vector<16x256xf32> to vector<16x256xbf16>
    %c0_16 = arith.constant 0 : index
    %c0_17 = arith.constant 0 : index
    %35 = vector.load %arg6[%c0_16, %c0_17] : memref<256x256xbf16, #tpu.memory_space<vmem>>, vector<256x256xbf16>
    %cst_18 = arith.constant dense<0.000000e+00> : vector<16x256xf32>
    %36 = tpu.matmul %34, %35, %cst_18 {dimension_numbers = #tpu.dot_dimension_numbers<[1], [0], [0], [1], [0, 0, 1, 1], [], []>} : vector<16x256xbf16>, vector<256x256xbf16>, vector<16x256xf32> -> vector<16x256xf32>
    %cst_19 = arith.constant dense<0.000000e+00> : vector<256xf32>
    %37 = vector.multi_reduction <add>, %36, %cst_19 [0] : vector<16x256xf32> to vector<256xf32>
    %38 = vector.shape_cast %37 : vector<256xf32> to vector<1x256xf32>
    %39 = arith.mulf %36, %36 : vector<16x256xf32>
    %cst_20 = arith.constant dense<0.000000e+00> : vector<256xf32>
    %40 = vector.multi_reduction <add>, %39, %cst_20 [0] : vector<16x256xf32> to vector<256xf32>
    %41 = vector.shape_cast %40 : vector<256xf32> to vector<1x256xf32>
    %cst_21 = arith.constant 6.250000e-02 : f32
    %42 = vector.broadcast %cst_21 : f32 to vector<1x256xf32>
    %43 = arith.mulf %38, %42 : vector<1x256xf32>
    %cst_22 = arith.constant 6.250000e-02 : f32
    %44 = vector.broadcast %cst_22 : f32 to vector<1x256xf32>
    %45 = arith.mulf %41, %44 : vector<1x256xf32>
    %46 = arith.mulf %43, %43 : vector<1x256xf32>
    %47 = arith.subf %45, %46 : vector<1x256xf32>
    %cst_23 = arith.constant 0.000000e+00 : f32
    %48 = vector.broadcast %cst_23 : f32 to vector<1x256xf32>
    %49 = arith.maximumf %47, %48 : vector<1x256xf32>
    %c0_24 = arith.constant 0 : index
    %c0_25 = arith.constant 0 : index
    %50 = vector.load %arg7[%c0_24, %c0_25] : memref<1x256xf32, #tpu.memory_space<vmem>>, vector<1x256xf32>
    %cst_26 = arith.constant 8.000000e-01 : f32
    %51 = vector.broadcast %cst_26 : f32 to vector<1x256xf32>
    %52 = arith.addf %49, %51 : vector<1x256xf32>
    %53 = math.rsqrt %52 : vector<1x256xf32>
    %54 = arith.mulf %50, %53 : vector<1x256xf32>
    %c0_27 = arith.constant 0 : index
    %c0_28 = arith.constant 0 : index
    %55 = vector.load %arg8[%c0_27, %c0_28] : memref<1x256xf32, #tpu.memory_space<vmem>>, vector<1x256xf32>
    %56 = arith.mulf %43, %54 : vector<1x256xf32>
    %57 = arith.subf %55, %56 : vector<1x256xf32>
    %58 = vector.broadcast %54 : vector<1x256xf32> to vector<16x256xf32>
    %59 = arith.mulf %36, %58 : vector<16x256xf32>
    %60 = vector.broadcast %57 : vector<1x256xf32> to vector<16x256xf32>
    %61 = arith.addf %59, %60 : vector<16x256xf32>
    %cst_29 = arith.constant 2.000000e-01 : f32
    %62 = vector.broadcast %cst_29 : f32 to vector<16x256xf32>
    %63 = arith.mulf %61, %62 : vector<16x256xf32>
    %64 = arith.maximumf %61, %63 : vector<16x256xf32>
    %65 = arith.truncf %64 : vector<16x256xf32> to vector<16x256xbf16>
    %c0_30 = arith.constant 0 : index
    %c0_31 = arith.constant 0 : index
    %66 = vector.load %arg9[%c0_30, %c0_31] : memref<256x256xbf16, #tpu.memory_space<vmem>>, vector<256x256xbf16>
    %cst_32 = arith.constant dense<0.000000e+00> : vector<16x256xf32>
    %67 = tpu.matmul %65, %66, %cst_32 {dimension_numbers = #tpu.dot_dimension_numbers<[1], [0], [0], [1], [0, 0, 1, 1], [], []>} : vector<16x256xbf16>, vector<256x256xbf16>, vector<16x256xf32> -> vector<16x256xf32>
    %cst_33 = arith.constant dense<0.000000e+00> : vector<256xf32>
    %68 = vector.multi_reduction <add>, %67, %cst_33 [0] : vector<16x256xf32> to vector<256xf32>
    %69 = vector.shape_cast %68 : vector<256xf32> to vector<1x256xf32>
    %70 = arith.mulf %67, %67 : vector<16x256xf32>
    %cst_34 = arith.constant dense<0.000000e+00> : vector<256xf32>
    %71 = vector.multi_reduction <add>, %70, %cst_34 [0] : vector<16x256xf32> to vector<256xf32>
    %72 = vector.shape_cast %71 : vector<256xf32> to vector<1x256xf32>
    %cst_35 = arith.constant 6.250000e-02 : f32
    %73 = vector.broadcast %cst_35 : f32 to vector<1x256xf32>
    %74 = arith.mulf %69, %73 : vector<1x256xf32>
    %cst_36 = arith.constant 6.250000e-02 : f32
    %75 = vector.broadcast %cst_36 : f32 to vector<1x256xf32>
    %76 = arith.mulf %72, %75 : vector<1x256xf32>
    %77 = arith.mulf %74, %74 : vector<1x256xf32>
    %78 = arith.subf %76, %77 : vector<1x256xf32>
    %cst_37 = arith.constant 0.000000e+00 : f32
    %79 = vector.broadcast %cst_37 : f32 to vector<1x256xf32>
    %80 = arith.maximumf %78, %79 : vector<1x256xf32>
    %c0_38 = arith.constant 0 : index
    %c0_39 = arith.constant 0 : index
    %81 = vector.load %arg10[%c0_38, %c0_39] : memref<1x256xf32, #tpu.memory_space<vmem>>, vector<1x256xf32>
    %cst_40 = arith.constant 8.000000e-01 : f32
    %82 = vector.broadcast %cst_40 : f32 to vector<1x256xf32>
    %83 = arith.addf %80, %82 : vector<1x256xf32>
    %84 = math.rsqrt %83 : vector<1x256xf32>
    %85 = arith.mulf %81, %84 : vector<1x256xf32>
    %c0_41 = arith.constant 0 : index
    %c0_42 = arith.constant 0 : index
    %86 = vector.load %arg11[%c0_41, %c0_42] : memref<1x256xf32, #tpu.memory_space<vmem>>, vector<1x256xf32>
    %87 = arith.mulf %74, %85 : vector<1x256xf32>
    %88 = arith.subf %86, %87 : vector<1x256xf32>
    %89 = vector.broadcast %85 : vector<1x256xf32> to vector<16x256xf32>
    %90 = arith.mulf %67, %89 : vector<16x256xf32>
    %91 = vector.broadcast %88 : vector<1x256xf32> to vector<16x256xf32>
    %92 = arith.addf %90, %91 : vector<16x256xf32>
    %cst_43 = arith.constant 2.000000e-01 : f32
    %93 = vector.broadcast %cst_43 : f32 to vector<16x256xf32>
    %94 = arith.mulf %92, %93 : vector<16x256xf32>
    %95 = arith.maximumf %92, %94 : vector<16x256xf32>
    %c0_44 = arith.constant 0 : index
    %c0_45 = arith.constant 0 : index
    %96 = vector.load %arg12[%c0_44, %c0_45] : memref<1x256xf32, #tpu.memory_space<vmem>>, vector<1x256xf32>
    %97 = vector.broadcast %96 : vector<1x256xf32> to vector<16x256xf32>
    %98 = arith.mulf %95, %97 : vector<16x256xf32>
    %cst_46 = arith.constant dense<0.000000e+00> : vector<16xf32>
    %99 = vector.multi_reduction <add>, %98, %cst_46 [1] : vector<16x256xf32> to vector<16xf32>
    %100 = vector.shape_cast %99 : vector<16xf32> to vector<1x16xf32>
    %cst_47 = arith.constant 0.000000e+00 : f32
    %101 = vector.broadcast %cst_47 : f32 to vector<1x16xf32>
    %102 = arith.subf %101, %100 : vector<1x16xf32>
    %103 = math.exp %102 : vector<1x16xf32>
    %cst_48 = arith.constant 1.000000e+00 : f32
    %104 = vector.broadcast %cst_48 : f32 to vector<1x16xf32>
    %105 = arith.addf %104, %103 : vector<1x16xf32>
    %cst_49 = arith.constant 1.000000e+00 : f32
    %106 = vector.broadcast %cst_49 : f32 to vector<1x16xf32>
    %107 = arith.divf %106, %105 : vector<1x16xf32>
    %c0_50 = arith.constant 0 : index
    %c0_51 = arith.constant 0 : index
    %108 = vector.load %arg13[%c0_50, %c0_51] : memref<1x16xf32, #tpu.memory_space<vmem>>, vector<1x16xf32>
    tpu.vector_store %arg13[%c0_50, %c0_51], %107 {strides = array<i32>} : memref<1x16xf32, #tpu.memory_space<vmem>>, vector<1x16xf32>,
    return
  }
}

</mosaic_0001>

<llo_original>
// kernel: tpu_custom_call.1
$region0: #{tpu_custom_call.1}
  #allocation0 [shape = 'u32[]', space=smem, size = 0x4, offset = 0x4, fixed_abs, tag = 'smem constant byte address 0x4 - core index']
  #allocation1 [shape = 'u32[144,128]{1,0:T(1,128)}', space=vmem, size = 0x12000, scoped, tag = 'internal scratch']
  %s0 = inlined_call_operand.vmem [shape: f32[16,16], index: 0, kind: input, shape index: {}]
  %s1 = inlined_call_operand.hbm [shape: f32[16,16], index: 1, kind: input, shape index: {}]
  %s2 = inlined_call_operand.vmem [shape: f32[16,1], index: 2, kind: input, shape index: {}]
  %s3 = inlined_call_operand.hbm [shape: bf16[32,256], index: 3, kind: input, shape index: {}]
  %s4 = inlined_call_operand.vmem [shape: f32[1,256], index: 4, kind: input, shape index: {}]
  %s5 = inlined_call_operand.vmem [shape: f32[1,256], index: 5, kind: input, shape index: {}]
  %s6 = inlined_call_operand.hbm [shape: bf16[256,256], index: 6, kind: input, shape index: {}]
  %s7 = inlined_call_operand.vmem [shape: f32[1,256], index: 7, kind: input, shape index: {}]
  %s8 = inlined_call_operand.vmem [shape: f32[1,256], index: 8, kind: input, shape index: {}]
  %s9 = inlined_call_operand.hbm [shape: bf16[256,256], index: 9, kind: input, shape index: {}]
  %s10 = inlined_call_operand.vmem [shape: f32[1,256], index: 10, kind: input, shape index: {}]
  %s11 = inlined_call_operand.vmem [shape: f32[1,256], index: 11, kind: input, shape index: {}]
  %s12 = inlined_call_operand.vmem [shape: f32[1,256], index: 12, kind: input, shape index: {}]
  %s13 = inlined_call_operand.hbm [shape: f32[1,16], index: 13, kind: output, shape index: {}]
  %s14 = sld [smem:[#allocation0]]
  $region78: #{tpu_custom_call.1} parent=0
    _
  %s16 = ssub.s32 1, %s14
  %s17 = scalar_select 0, %s16, %s14
  $region1: #{tpu_custom_call.1} parent=0
    #allocation2 [shape = 'u8[8192]{0}', space=vmem, size = 0x2000, scoped, tag = 'input window, operand 1, single buffered']
    #allocation3 [shape = 's32[1]{0}', space=sflag, size = 0x4, scoped, tag = 'scoped memory for tpu_custom_call.1']
    #allocation4 [shape = 's32[1]{0}', space=sflag, size = 0x4, scoped, tag = 'scoped memory for tpu_custom_call.1']
    #allocation5 [shape = 'u8[16384]{0}', space=vmem, size = 0x4000, scoped, tag = 'input window, operand 3, single buffered']
    #allocation6 [shape = 's32[1]{0}', space=sflag, size = 0x4, scoped, tag = 'scoped memory for tpu_custom_call.1']
    #allocation7 [shape = 'u8[131072]{0}', space=vmem, size = 0x20000, scoped, tag = 'input window, operand 6, single buffered']
    #allocation8 [shape = 'u8[131072]{0}', space=vmem, size = 0x20000, scoped, tag = 'input window, operand 9, single buffered']
    #allocation9 [shape = 's32[1]{0}', space=sflag, size = 0x4, scoped, tag = 'scoped memory for tpu_custom_call.1']
    #allocation10 [shape = 'u8[512]{0}', space=vmem, size = 0x400, scoped, tag = 'output window, operand 0, single buffered']
    %18 = vsyncpa [#allocation3], 0
    %19 = vsyncpa [#allocation6], 0
    %20 = vsyncpa [#allocation9], 0
    %21 = vsyncpa [#allocation4], 0
    // Predicated region
    $region2: #{tpu_custom_call.1} parent=1 // pred_check
      _
    $region3: #{tpu_custom_call.1} parent=1 // pred_check_branch
      %23 = sbr.rel (0) target = $region5
    $region4: #{tpu_custom_call.1} parent=1 // pred_region
      _
    $region5: #{tpu_custom_call.1} parent=1 // pred_fallthru
      _
    // Predicated region
    $region6: #{tpu_custom_call.1} parent=1 // pred_check
      _
    $region7: #{tpu_custom_call.1} parent=1 // pred_check_branch
      %25 = sbr.rel (0) target = $region9
    $region8: #{tpu_custom_call.1} parent=1 // pred_region
      %s27 = ssub.s32 256, 256
      %28 = vsyncadd [#allocation3], %s27
      %s29 = sshll.u32 [#allocation2], 4
      %s30 = int_to_ptr.vmem [resolvable:$true] %s29
      %35 = dma.hbm_to_vmem [thread:$0]  %s1, 256, %s30, [#allocation3], 128, 128, 8
    $region9: #{tpu_custom_call.1} parent=1 // pred_fallthru
      _
    // Predicated region
    $region10: #{tpu_custom_call.1} parent=1 // pred_check
      _
    $region11: #{tpu_custom_call.1} parent=1 // pred_check_branch
      %37 = sbr.rel (0) target = $region13
    $region12: #{tpu_custom_call.1} parent=1 // pred_region
      _
    $region13: #{tpu_custom_call.1} parent=1 // pred_fallthru
      _
    // Predicated region
    $region14: #{tpu_custom_call.1} parent=1 // pred_check
      _
    $region15: #{tpu_custom_call.1} parent=1 // pred_check_branch
      %39 = sbr.rel (0) target = $region17
    $region16: #{tpu_custom_call.1} parent=1 // pred_region
      %s41 = ssub.s32 512, 512
      %42 = vsyncadd [#allocation6], %s41
      %s43 = sshll.u32 [#allocation5], 4
      %s44 = int_to_ptr.vmem [resolvable:$true] %s43
      %49 = dma.hbm_to_vmem [thread:$0]  %s3, 512, %s44, [#allocation6], 128, 128, 8
    $region17: #{tpu_custom_call.1} parent=1 // pred_fallthru
      _
    // Predicated region
    $region18: #{tpu_custom_call.1} parent=1 // pred_check
      _
    $region19: #{tpu_custom_call.1} parent=1 // pred_check_branch
      %51 = sbr.rel (0) target = $region21
    $region20: #{tpu_custom_call.1} parent=1 // pred_region
      _
    $region21: #{tpu_custom_call.1} parent=1 // pred_fallthru
      _
    // Predicated region
    $region22: #{tpu_custom_call.1} parent=1 // pred_check
      _
    $region23: #{tpu_custom_call.1} parent=1 // pred_check_branch
      %53 = sbr.rel (0) target = $region25
    $region24: #{tpu_custom_call.1} parent=1 // pred_region
      _
    $region25: #{tpu_custom_call.1} parent=1 // pred_fallthru
      _
    // Predicated region
    $region26: #{tpu_custom_call.1} parent=1 // pred_check
      _
    $region27: #{tpu_custom_call.1} parent=1 // pred_check_branch
      %55 = sbr.rel (0) target = $region29
    $region28: #{tpu_custom_call.1} parent=1 // pred_region
      %s57 = ssub.s32 4096, 4096
      %58 = vsyncadd [#allocation6], %s57
      %s59 = sshll.u32 [#allocation7], 4
      %s60 = int_to_ptr.vmem [resolvable:$true] %s59
      %65 = dma.hbm_to_vmem [thread:$0]  %s6, 4096, %s60, [#allocation6], 128, 128, 8
    $region29: #{tpu_custom_call.1} parent=1 // pred_fallthru
      _
    // Predicated region
    $region30: #{tpu_custom_call.1} parent=1 // pred_check
      _
    $region31: #{tpu_custom_call.1} parent=1 // pred_check_branch
      %67 = sbr.rel (0) target = $region33
    $region32: #{tpu_custom_call.1} parent=1 // pred_region
      _
    $region33: #{tpu_custom_call.1} parent=1 // pred_fallthru
      _
    // Predicated region
    $region34: #{tpu_custom_call.1} parent=1 // pred_check
      _
    $region35: #{tpu_custom_call.1} parent=1 // pred_check_branch
      %69 = sbr.rel (0) target = $region37
    $region36: #{tpu_custom_call.1} parent=1 // pred_region
      _
    $region37: #{tpu_custom_call.1} parent=1 // pred_fallthru
      _
    // Predicated region
    $region38: #{tpu_custom_call.1} parent=1 // pred_check
      _
    $region39: #{tpu_custom_call.1} parent=1 // pred_check_branch
      %71 = sbr.rel (0) target = $region41
    $region40: #{tpu_custom_call.1} parent=1 // pred_region
      %s73 = ssub.s32 4096, 4096
      %74 = vsyncadd [#allocation9], %s73
      %s75 = sshll.u32 [#allocation8], 4
      %s76 = int_to_ptr.vmem [resolvable:$true] %s75
      %81 = dma.hbm_to_vmem [thread:$0]  %s9, 4096, %s76, [#allocation9], 128, 128, 8
    $region41: #{tpu_custom_call.1} parent=1 // pred_fallthru
      _
    // Predicated region
    $region42: #{tpu_custom_call.1} parent=1 // pred_check
      _
    $region43: #{tpu_custom_call.1} parent=1 // pred_check_branch
      %83 = sbr.rel (0) target = $region45
    $region44: #{tpu_custom_call.1} parent=1 // pred_region
      _
    $region45: #{tpu_custom_call.1} parent=1 // pred_fallthru
      _
    // Predicated region
    $region46: #{tpu_custom_call.1} parent=1 // pred_check
      _
    $region47: #{tpu_custom_call.1} parent=1 // pred_check_branch
      %85 = sbr.rel (0) target = $region49
    $region48: #{tpu_custom_call.1} parent=1 // pred_region
      _
    $region49: #{tpu_custom_call.1} parent=1 // pred_fallthru
      _
    // Predicated region
    $region50: #{tpu_custom_call.1} parent=1 // pred_check
      _
    $region51: #{tpu_custom_call.1} parent=1 // pred_check_branch
      %87 = sbr.rel (0) target = $region53
    $region52: #{tpu_custom_call.1} parent=1 // pred_region
      _
    $region53: #{tpu_custom_call.1} parent=1 // pred_fallthru
      _
    // Predicated region
    $region54: #{tpu_custom_call.1} parent=1 // pred_check
      _
    $region55: #{tpu_custom_call.1} parent=1 // pred_check_branch
      %89 = sbr.rel (0) target = $region57
    $region56: #{tpu_custom_call.1} parent=1 // pred_region
      %90 = dma.done [#allocation3], 256
    $region57: #{tpu_custom_call.1} parent=1 // pred_fallthru
      _
    // Predicated region
    $region58: #{tpu_custom_call.1} parent=1 // pred_check
      _
    $region59: #{tpu_custom_call.1} parent=1 // pred_check_branch
      %92 = sbr.rel (0) target = $region61
    $region60: #{tpu_custom_call.1} parent=1 // pred_region
      %93 = dma.done [#allocation6], 512
    $region61: #{tpu_custom_call.1} parent=1 // pred_fallthru
      _
    // Predicated region
    $region62: #{tpu_custom_call.1} parent=1 // pred_check
      _
    $region63: #{tpu_custom_call.1} parent=1 // pred_check_branch
      %95 = sbr.rel (0) target = $region65
    $region64: #{tpu_custom_call.1} parent=1 // pred_region
      %96 = dma.done [#allocation6], 4096
    $region65: #{tpu_custom_call.1} parent=1 // pred_fallthru
      _
    // Predicated region
    $region66: #{tpu_custom_call.1} parent=1 // pred_check
      _
    $region67: #{tpu_custom_call.1} parent=1 // pred_check_branch
      %98 = sbr.rel (0) target = $region69
    $region68: #{tpu_custom_call.1} parent=1 // pred_region
      %99 = dma.done [#allocation9], 4096
    $region69: #{tpu_custom_call.1} parent=1 // pred_fallthru
      _
    %v101 = vld [vmem:[%s0] sm:$0xff]
    %v102 = vld [vmem:[%s0 + $0x8] sm:$0xff]
    %v103 = vld [vmem:[#allocation2] sm:$0xff]
    %v104 = vld [vmem:[#allocation2 + $0x8] sm:$0xff]
    %107 = vrot.lane.b32.xlu0 %v103, 16
    %v108 = vpop.permute.xlu0 %107
    %109 = vrot.lane.b32.xlu0 %v104, 16
    %v110 = vpop.permute.xlu0 %109
    %vm113 = vcmask 130048
    %v114 = vsel %vm113, %v101, %v108
    %v115 = vsel %vm113, %v102, %v110
    %v116 = vpack.c.bf16 %v115, %v114
    %v117 = vld [vmem:[#allocation5] sm:$0xff]
    %v118 = vld [vmem:[#allocation5 + $0x8] sm:$0xff]
    %v119 = vld [vmem:[#allocation5 + $0x10] sm:$0xff]
    %v120 = vld [vmem:[#allocation5 + $0x18] sm:$0xff]
    %v125 = vunpack.c.l.b16 %v117
    %v126 = vunpack.c.h.b16 %v117
    %v127 = vunpack.c.l.b16 %v118
    %v128 = vunpack.c.h.b16 %v118
    %v129 = vunpack.c.l.b16 %v119
    %v130 = vunpack.c.h.b16 %v119
    %v131 = vunpack.c.l.b16 %v120
    %v132 = vunpack.c.h.b16 %v120
    %v133 = vpack.c.b16 %v127, %v125
    %v134 = vpack.c.b16 %v128, %v126
    %v135 = vpack.c.b16 %v131, %v129
    %v136 = vpack.c.b16 %v132, %v130
    %vm141 = vcmask 261120
    %v143 = vsel %vm141, %v116, 0
    %145 = vmatprep.subr.bf16.mxu0 %v134
    %146 = vmatpush1.bf16.msra.mxu0 %v133
    %147 = vmatprep.subr.bf16.mxu0 %v136
    %148 = vmatpush1.bf16.msra.mxu0 %v135
    %149 = vmatprep.subr.bf16.mxu0 0
    %150 = vmatpush1.bf16.msra.mxu0 0
    %151 = vmatprep.subr.bf16.mxu0 0
    %152 = vmatpush1.bf16.msra.mxu0 0
    %153 = vmatprep.subr.bf16.mxu0 0
    %154 = vmatpush1.bf16.msra.mxu0 0
    %155 = vmatprep.subr.bf16.mxu0 0
    %156 = vmatpush1.bf16.msra.mxu0 0
    %157 = vmatprep.subr.bf16.mxu0 0
    %158 = vmatpush1.bf16.msra.mxu0 0
    %159 = vmatprep.subr.bf16.mxu0 0
    %160 = vmatpush1.bf16.msra.mxu0 0
    %161 = vmatprep.subr.bf16.mxu0 0
    %162 = vmatpush1.bf16.msra.mxu0 0
    %163 = vmatprep.subr.bf16.mxu0 0
    %164 = vmatpush1.bf16.msra.mxu0 0
    %165 = vmatprep.subr.bf16.mxu0 0
    %166 = vmatpush1.bf16.msra.mxu0 0
    %167 = vmatprep.subr.bf16.mxu0 0
    %168 = vmatpush1.bf16.msra.mxu0 0
    %169 = vmatprep.subr.bf16.mxu0 0
    %170 = vmatpush1.bf16.msra.mxu0 0
    %171 = vmatprep.subr.bf16.mxu0 0
    %172 = vmatpush1.bf16.msra.mxu0 0
    %173 = vmatprep.subr.bf16.mxu0 0
    %174 = vmatpush1.bf16.msra.mxu0 0
    %175 = vmatprep.subr.bf16.mxu0 0
    %176 = vmatpush1.bf16.msra.mxu0 0
    %177 = vmatprep.mubr.bf16.mxu0 0
    %178 = vmatmul.mubr.bf16.gmra.mrb[0].mxu0 %v143
    %v179 = vpop.f32.mrb[0].mxu0
    %v180 = vadd.f32 0.0, %v179
    %v181 = vpop.f32.mrb[0].mxu0
    %v182 = vadd.f32 0.0, %v181
    %v183 = vpop.f32.mrb[0].mxu0
    %v184 = vadd.f32 0.0, %v183
    %v185 = vpop.f32.mrb[0].mxu0
    %v186 = vadd.f32 0.0, %v185
    %187 = vdwg.mxu0
    %v188 = vadd.f32 %v180, %v184
    %v189 = vrot.slane %v188, 4
    %v190 = vadd.f32 %v188, %v189
    %v191 = vrot.slane %v190, 2
    %v192 = vadd.f32 %v190, %v191
    %v193 = vrot.slane %v192, 1
    %v194 = vadd.f32 %v192, %v193
    %v195 = vadd.f32 %v182, %v186
    %v196 = vrot.slane %v195, 4
    %v197 = vadd.f32 %v195, %v196
    %v198 = vrot.slane %v197, 2
    %v199 = vadd.f32 %v197, %v198
    %v200 = vrot.slane %v199, 1
    %v201 = vadd.f32 %v199, %v200
    %v202 = vmul.f32 %v180, %v180
    %v203 = vmul.f32 %v182, %v182
    %v204 = vmul.f32 %v184, %v184
    %v205 = vmul.f32 %v186, %v186
    %v206 = vadd.f32 %v202, %v204
    %v207 = vrot.slane %v206, 4
    %v208 = vadd.f32 %v206, %v207
    %v209 = vrot.slane %v208, 2
    %v210 = vadd.f32 %v208, %v209
    %v211 = vrot.slane %v210, 1
    %v212 = vadd.f32 %v210, %v211
    %v213 = vadd.f32 %v203, %v205
    %v214 = vrot.slane %v213, 4
    %v215 = vadd.f32 %v213, %v214
    %v216 = vrot.slane %v215, 2
    %v217 = vadd.f32 %v215, %v216
    %v218 = vrot.slane %v217, 1
    %v219 = vadd.f32 %v217, %v218
    %v220 = vmul.f32 %v194, 0.0625
    %v221 = vmul.f32 %v201, 0.0625
    %v222 = vmul.f32 %v212, 0.0625
    %v223 = vmul.f32 %v219, 0.0625
    %v224 = vmul.f32 %v220, %v220
    %v225 = vmul.f32 %v221, %v221
    %v226 = vsub.f32 %v222, %v224
    %v227 = vsub.f32 %v223, %v225
    %v228 = vmax.f32 %v226, 0.0
    %v229 = vmax.f32 %v227, 0.0
    %v230 = vld [vmem:[%s4] sm:$0x3]
    %v231 = vadd.f32 %v228, 0.8
    %v232 = vadd.f32 %v229, 0.8
    %v233 = vrsqrt.pop %v231
    %v234 = vrsqrt.pop %v232
    %v237 = vcombine.low %v233, %v234
    %v239 = vunpack.c.l.s4 1966171168
    %v240 = vunpack.c.0.s8 %v239
    %v241 = vlaneseq
    %v242 = vshrl.u32 %v241, 7
    %v243 = vsub.s32 %v240, %v242
    %v244 = vrot.slane %v237, %v243
    %v246 = vunpack.c.l.s4 1966171168
    %v247 = vunpack.c.0.s8 %v246
    %v248 = vlaneseq
    %v249 = vshrl.u32 %v248, 7
    %v250 = vsub.s32 %v247, %v249
    %v251 = vrot.slane %v244, %v250
    %v253 = vmul.f32 %v230, %v251
    %v254 = vld [vmem:[%s5] sm:$0x3]
    %v256 = vlaneseq
    %v257 = vshrl.u32 %v256, 7
    %v258 = vsub.s32 0, %v257
    %v259 = vrot.slane %v253, %v258
    %v260 = vlaneseq
    %v261 = vshrl.u32 %v260, 7
    %v262 = vsub.s32 1, %v261
    %v263 = vrot.slane %v253, %v262
    %v266 = vmul.f32 %v220, %v259
    %v267 = vmul.f32 %v221, %v263
    %v270 = vcombine.low %v266, %v267
    %v272 = vunpack.c.l.s4 1966171168
    %v273 = vunpack.c.0.s8 %v272
    %v274 = vlaneseq
    %v275 = vshrl.u32 %v274, 7
    %v276 = vsub.s32 %v273, %v275
    %v277 = vrot.slane %v270, %v276
    %v279 = vunpack.c.l.s4 1966171168
    %v280 = vunpack.c.0.s8 %v279
    %v281 = vlaneseq
    %v282 = vshrl.u32 %v281, 7
    %v283 = vsub.s32 %v280, %v282
    %v284 = vrot.slane %v277, %v283
    %v286 = vsub.f32 %v254, %v284
    %v287 = vmul.f32 %v180, %v259
    %v288 = vmul.f32 %v182, %v263
    %v289 = vmul.f32 %v184, %v259
    %v290 = vmul.f32 %v186, %v263
    %v292 = vlaneseq
    %v293 = vshrl.u32 %v292, 7
    %v294 = vsub.s32 0, %v293
    %v295 = vrot.slane %v286, %v294
    %v296 = vlaneseq
    %v297 = vshrl.u32 %v296, 7
    %v298 = vsub.s32 1, %v297
    %v299 = vrot.slane %v286, %v298
    %v302 = vadd.f32 %v287, %v295
    %v303 = vadd.f32 %v288, %v299
    %v304 = vadd.f32 %v289, %v295
    %v305 = vadd.f32 %v290, %v299
    %v306 = vmul.f32 %v302, 0.2
    %v307 = vmul.f32 %v303, 0.2
    %v308 = vmul.f32 %v304, 0.2
    %v309 = vmul.f32 %v305, 0.2
    %v310 = vmax.f32 %v302, %v306
    %v311 = vmax.f32 %v303, %v307
    %v312 = vmax.f32 %v304, %v308
    %v313 = vmax.f32 %v305, %v309
    %v314 = vpack.c.bf16 %v312, %v310
    %v315 = vpack.c.bf16 %v313, %v311
    %v316 = vld [vmem:[#allocation7] sm:$0xff]
    %v317 = vld [vmem:[#allocation7 + $0x8] sm:$0xff]
    %v318 = vld [vmem:[#allocation7 + $0x10] sm:$0xff]
    %v319 = vld [vmem:[#allocation7 + $0x18] sm:$0xff]
    %v320 = vld [vmem:[#allocation7 + $0x20] sm:$0xff]
    %v321 = vld [vmem:[#allocation7 + $0x28] sm:$0xff]
    %v322 = vld [vmem:[#allocation7 + $0x30] sm:$0xff]
    %v323 = vld [vmem:[#allocation7 + $0x38] sm:$0xff]
    %v324 = vld [vmem:[#allocation7 + $0x40] sm:$0xff]
    %v325 = vld [vmem:[#allocation7 + $0x48] sm:$0xff]
    %v326 = vld [vmem:[#allocation7 + $0x50] sm:$0xff]
    %v327 = vld [vmem:[#allocation7 + $0x58] sm:$0xff]
    %v328 = vld [vmem:[#allocation7 + $0x60] sm:$0xff]
    %v329 = vld [vmem:[#allocation7 + $0x68] sm:$0xff]
    %v330 = vld [vmem:[#allocation7 + $0x70] sm:$0xff]
    %v331 = vld [vmem:[#allocation7 + $0x78] sm:$0xff]
    %v332 = vld [vmem:[#allocation7 + $0x80] sm:$0xff]
    %v333 = vld [vmem:[#allocation7 + $0x88] sm:$0xff]
    %v334 = vld [vmem:[#allocation7 + $0x90] sm:$0xff]
    %v335 = vld [vmem:[#allocation7 + $0x98] sm:$0xff]
    %v336 = vld [vmem:[#allocation7 + $0xa0] sm:$0xff]
    %v337 = vld [vmem:[#allocation7 + $0xa8] sm:$0xff]
    %v338 = vld [vmem:[#allocation7 + $0xb0] sm:$0xff]
    %v339 = vld [vmem:[#allocation7 + $0xb8] sm:$0xff]
    %v340 = vld [vmem:[#allocation7 + $0xc0] sm:$0xff]
    %v341 = vld [vmem:[#allocation7 + $0xc8] sm:$0xff]
    %v342 = vld [vmem:[#allocation7 + $0xd0] sm:$0xff]
    %v343 = vld [vmem:[#allocation7 + $0xd8] sm:$0xff]
    %v344 = vld [vmem:[#allocation7 + $0xe0] sm:$0xff]
    %v345 = vld [vmem:[#allocation7 + $0xe8] sm:$0xff]
    %v346 = vld [vmem:[#allocation7 + $0xf0] sm:$0xff]
    %v347 = vld [vmem:[#allocation7 + $0xf8] sm:$0xff]
    %v380 = vunpack.c.l.b16 %v316
    %v381 = vunpack.c.h.b16 %v316
    %v382 = vunpack.c.l.b16 %v317
    %v383 = vunpack.c.h.b16 %v317
    %v384 = vunpack.c.l.b16 %v318
    %v385 = vunpack.c.h.b16 %v318
    %v386 = vunpack.c.l.b16 %v319
    %v387 = vunpack.c.h.b16 %v319
    %v388 = vunpack.c.l.b16 %v320
    %v389 = vunpack.c.h.b16 %v320
    %v390 = vunpack.c.l.b16 %v321
    %v391 = vunpack.c.h.b16 %v321
    %v392 = vunpack.c.l.b16 %v322
    %v393 = vunpack.c.h.b16 %v322
    %v394 = vunpack.c.l.b16 %v323
    %v395 = vunpack.c.h.b16 %v323
    %v396 = vunpack.c.l.b16 %v324
    %v397 = vunpack.c.h.b16 %v324
    %v398 = vunpack.c.l.b16 %v325
    %v399 = vunpack.c.h.b16 %v325
    %v400 = vunpack.c.l.b16 %v326
    %v401 = vunpack.c.h.b16 %v326
    %v402 = vunpack.c.l.b16 %v327
    %v403 = vunpack.c.h.b16 %v327
    %v404 = vunpack.c.l.b16 %v328
    %v405 = vunpack.c.h.b16 %v328
    %v406 = vunpack.c.l.b16 %v329
    %v407 = vunpack.c.h.b16 %v329
    %v408 = vunpack.c.l.b16 %v330
    %v409 = vunpack.c.h.b16 %v330
    %v410 = vunpack.c.l.b16 %v331
    %v411 = vunpack.c.h.b16 %v331
    %v412 = vunpack.c.l.b16 %v332
    %v413 = vunpack.c.h.b16 %v332
    %v414 = vunpack.c.l.b16 %v333
    %v415 = vunpack.c.h.b16 %v333
    %v416 = vunpack.c.l.b16 %v334
    %v417 = vunpack.c.h.b16 %v334
    %v418 = vunpack.c.l.b16 %v335
    %v419 = vunpack.c.h.b16 %v335
    %v420 = vunpack.c.l.b16 %v336
    %v421 = vunpack.c.h.b16 %v336
    %v422 = vunpack.c.l.b16 %v337
    %v423 = vunpack.c.h.b16 %v337
    %v424 = vunpack.c.l.b16 %v338
    %v425 = vunpack.c.h.b16 %v338
    %v426 = vunpack.c.l.b16 %v339
    %v427 = vunpack.c.h.b16 %v339
    %v428 = vunpack.c.l.b16 %v340
    %v429 = vunpack.c.h.b16 %v340
    %v430 = vunpack.c.l.b16 %v341
    %v431 = vunpack.c.h.b16 %v341
    %v432 = vunpack.c.l.b16 %v342
    %v433 = vunpack.c.h.b16 %v342
    %v434 = vunpack.c.l.b16 %v343
    %v435 = vunpack.c.h.b16 %v343
    %v436 = vunpack.c.l.b16 %v344
    %v437 = vunpack.c.h.b16 %v344
    %v438 = vunpack.c.l.b16 %v345
    %v439 = vunpack.c.h.b16 %v345
    %v440 = vunpack.c.l.b16 %v346
    %v441 = vunpack.c.h.b16 %v346
    %v442 = vunpack.c.l.b16 %v347
    %v443 = vunpack.c.h.b16 %v347
    %v444 = vpack.c.b16 %v382, %v380
    %v445 = vpack.c.b16 %v383, %v381
    %v446 = vpack.c.b16 %v386, %v384
    %v447 = vpack.c.b16 %v387, %v385
    %v448 = vpack.c.b16 %v390, %v388
    %v449 = vpack.c.b16 %v391, %v389
    %v450 = vpack.c.b16 %v394, %v392
    %v451 = vpack.c.b16 %v395, %v393
    %v452 = vpack.c.b16 %v398, %v396
    %v453 = vpack.c.b16 %v399, %v397
    %v454 = vpack.c.b16 %v402, %v400
    %v455 = vpack.c.b16 %v403, %v401
    %v456 = vpack.c.b16 %v406, %v404
    %v457 = vpack.c.b16 %v407, %v405
    %v458 = vpack.c.b16 %v410, %v408
    %v459 = vpack.c.b16 %v411, %v409
    %v460 = vpack.c.b16 %v414, %v412
    %v461 = vpack.c.b16 %v415, %v413
    %v462 = vpack.c.b16 %v418, %v416
    %v463 = vpack.c.b16 %v419, %v417
    %v464 = vpack.c.b16 %v422, %v420
    %v465 = vpack.c.b16 %v423, %v421
    %v466 = vpack.c.b16 %v426, %v424
    %v467 = vpack.c.b16 %v427, %v425
    %v468 = vpack.c.b16 %v430, %v428
    %v469 = vpack.c.b16 %v431, %v429
    %v470 = vpack.c.b16 %v434, %v432
    %v471 = vpack.c.b16 %v435, %v433
    %v472 = vpack.c.b16 %v438, %v436
    %v473 = vpack.c.b16 %v439, %v437
    %v474 = vpack.c.b16 %v442, %v440
    %v475 = vpack.c.b16 %v443, %v441
    %508 = vmatprep.subr.bf16.mxu0 %v445
    %509 = vmatpush1.bf16.msra.mxu0 %v444
    %510 = vmatprep.subr.bf16.mxu0 %v447
    %511 = vmatpush1.bf16.msra.mxu0 %v446
    %512 = vmatprep.subr.bf16.mxu0 %v449
    %513 = vmatpush1.bf16.msra.mxu0 %v448
    %514 = vmatprep.subr.bf16.mxu0 %v451
    %515 = vmatpush1.bf16.msra.mxu0 %v450
    %516 = vmatprep.subr.bf16.mxu0 %v453
    %517 = vmatpush1.bf16.msra.mxu0 %v452
    %518 = vmatprep.subr.bf16.mxu0 %v455
    %519 = vmatpush1.bf16.msra.mxu0 %v454
    %520 = vmatprep.subr.bf16.mxu0 %v457
    %521 = vmatpush1.bf16.msra.mxu0 %v456
    %522 = vmatprep.subr.bf16.mxu0 %v459
    %523 = vmatpush1.bf16.msra.mxu0 %v458
    %524 = vmatprep.subr.bf16.mxu0 %v461
    %525 = vmatpush1.bf16.msra.mxu0 %v460
    %526 = vmatprep.subr.bf16.mxu0 %v463
    %527 = vmatpush1.bf16.msra.mxu0 %v462
    %528 = vmatprep.subr.bf16.mxu0 %v465
    %529 = vmatpush1.bf16.msra.mxu0 %v464
    %530 = vmatprep.subr.bf16.mxu0 %v467
    %531 = vmatpush1.bf16.msra.mxu0 %v466
    %532 = vmatprep.subr.bf16.mxu0 %v469
    %533 = vmatpush1.bf16.msra.mxu0 %v468
    %534 = vmatprep.subr.bf16.mxu0 %v471
    %535 = vmatpush1.bf16.msra.mxu0 %v470
    %536 = vmatprep.subr.bf16.mxu0 %v473
    %537 = vmatpush1.bf16.msra.mxu0 %v472
    %538 = vmatprep.subr.bf16.mxu0 %v475
    %539 = vmatpush1.bf16.msra.mxu0 %v474
    %540 = vmatprep.mubr.bf16.mxu0 %v315
    %541 = vmatmul.mubr.bf16.gmra.mrb[0].mxu0 %v314
    %v542 = vpop.f32.mrb[0].mxu0
    %v543 = vadd.f32 0.0, %v542
    %v544 = vpop.f32.mrb[0].mxu0
    %v545 = vadd.f32 0.0, %v544
    %v546 = vpop.f32.mrb[0].mxu0
    %v547 = vadd.f32 0.0, %v546
    %v548 = vpop.f32.mrb[0].mxu0
    %v549 = vadd.f32 0.0, %v548
    %550 = vdwg.mxu0
    %v551 = vadd.f32 %v543, %v547
    %v552 = vrot.slane %v551, 4
    %v553 = vadd.f32 %v551, %v552
    %v554 = vrot.slane %v553, 2
    %v555 = vadd.f32 %v553, %v554
    %v556 = vrot.slane %v555, 1
    %v557 = vadd.f32 %v555, %v556
    %v558 = vadd.f32 %v545, %v549
    %v559 = vrot.slane %v558, 4
    %v560 = vadd.f32 %v558, %v559
    %v561 = vrot.slane %v560, 2
    %v562 = vadd.f32 %v560, %v561
    %v563 = vrot.slane %v562, 1
    %v564 = vadd.f32 %v562, %v563
    %v565 = vmul.f32 %v543, %v543
    %v566 = vmul.f32 %v545, %v545
    %v567 = vmul.f32 %v547, %v547
    %v568 = vmul.f32 %v549, %v549
    %v569 = vadd.f32 %v565, %v567
    %v570 = vrot.slane %v569, 4
    %v571 = vadd.f32 %v569, %v570
    %v572 = vrot.slane %v571, 2
    %v573 = vadd.f32 %v571, %v572
    %v574 = vrot.slane %v573, 1
    %v575 = vadd.f32 %v573, %v574
    %v576 = vadd.f32 %v566, %v568
    %v577 = vrot.slane %v576, 4
    %v578 = vadd.f32 %v576, %v577
    %v579 = vrot.slane %v578, 2
    %v580 = vadd.f32 %v578, %v579
    %v581 = vrot.slane %v580, 1
    %v582 = vadd.f32 %v580, %v581
    %v583 = vmul.f32 %v557, 0.0625
    %v584 = vmul.f32 %v564, 0.0625
    %v585 = vmul.f32 %v575, 0.0625
    %v586 = vmul.f32 %v582, 0.0625
    %v587 = vmul.f32 %v583, %v583
    %v588 = vmul.f32 %v584, %v584
    %v589 = vsub.f32 %v585, %v587
    %v590 = vsub.f32 %v586, %v588
    %v591 = vmax.f32 %v589, 0.0
    %v592 = vmax.f32 %v590, 0.0
    %v593 = vld [vmem:[%s7] sm:$0x3]
    %v594 = vadd.f32 %v591, 0.8
    %v595 = vadd.f32 %v592, 0.8
    %v596 = vrsqrt.pop %v594
    %v597 = vrsqrt.pop %v595
    %v600 = vcombine.low %v596, %v597
    %v602 = vunpack.c.l.s4 1966171168
    %v603 = vunpack.c.0.s8 %v602
    %v604 = vlaneseq
    %v605 = vshrl.u32 %v604, 7
    %v606 = vsub.s32 %v603, %v605
    %v607 = vrot.slane %v600, %v606
    %v609 = vunpack.c.l.s4 1966171168
    %v610 = vunpack.c.0.s8 %v609
    %v611 = vlaneseq
    %v612 = vshrl.u32 %v611, 7
    %v613 = vsub.s32 %v610, %v612
    %v614 = vrot.slane %v607, %v613
    %v616 = vmul.f32 %v593, %v614
    %v617 = vld [vmem:[%s8] sm:$0x3]
    %v619 = vlaneseq
    %v620 = vshrl.u32 %v619, 7
    %v621 = vsub.s32 0, %v620
    %v622 = vrot.slane %v616, %v621
    %v623 = vlaneseq
    %v624 = vshrl.u32 %v623, 7
    %v625 = vsub.s32 1, %v624
    %v626 = vrot.slane %v616, %v625
    %v629 = vmul.f32 %v583, %v622
    %v630 = vmul.f32 %v584, %v626
    %v633 = vcombine.low %v629, %v630
    %v635 = vunpack.c.l.s4 1966171168
    %v636 = vunpack.c.0.s8 %v635
    %v637 = vlaneseq
    %v638 = vshrl.u32 %v637, 7
    %v639 = vsub.s32 %v636, %v638
    %v640 = vrot.slane %v633, %v639
    %v642 = vunpack.c.l.s4 1966171168
    %v643 = vunpack.c.0.s8 %v642
    %v644 = vlaneseq
    %v645 = vshrl.u32 %v644, 7
    %v646 = vsub.s32 %v643, %v645
    %v647 = vrot.slane %v640, %v646
    %v649 = vsub.f32 %v617, %v647
    %v650 = vmul.f32 %v543, %v622
    %v651 = vmul.f32 %v545, %v626
    %v652 = vmul.f32 %v547, %v622
    %v653 = vmul.f32 %v549, %v626
    %v655 = vlaneseq
    %v656 = vshrl.u32 %v655, 7
    %v657 = vsub.s32 0, %v656
    %v658 = vrot.slane %v649, %v657
    %v659 = vlaneseq
    %v660 = vshrl.u32 %v659, 7
    %v661 = vsub.s32 1, %v660
    %v662 = vrot.slane %v649, %v661
    %v665 = vadd.f32 %v650, %v658
    %v666 = vadd.f32 %v651, %v662
    %v667 = vadd.f32 %v652, %v658
    %v668 = vadd.f32 %v653, %v662
    %v669 = vmul.f32 %v665, 0.2
    %v670 = vmul.f32 %v666, 0.2
    %v671 = vmul.f32 %v667, 0.2
    %v672 = vmul.f32 %v668, 0.2
    %v673 = vmax.f32 %v665, %v669
    %v674 = vmax.f32 %v666, %v670
    %v675 = vmax.f32 %v667, %v671
    %v676 = vmax.f32 %v668, %v672
    %v677 = vpack.c.bf16 %v675, %v673
    %v678 = vpack.c.bf16 %v676, %v674
    %v679 = vld [vmem:[#allocation8] sm:$0xff]
    %v680 = vld [vmem:[#allocation8 + $0x8] sm:$0xff]
    %v681 = vld [vmem:[#allocation8 + $0x10] sm:$0xff]
    %v682 = vld [vmem:[#allocation8 + $0x18] sm:$0xff]
    %v683 = vld [vmem:[#allocation8 + $0x20] sm:$0xff]
    %v684 = vld [vmem:[#allocation8 + $0x28] sm:$0xff]
    %v685 = vld [vmem:[#allocation8 + $0x30] sm:$0xff]
    %v686 = vld [vmem:[#allocation8 + $0x38] sm:$0xff]
    %v687 = vld [vmem:[#allocation8 + $0x40] sm:$0xff]
    %v688 = vld [vmem:[#allocation8 + $0x48] sm:$0xff]
    %v689 = vld [vmem:[#allocation8 + $0x50] sm:$0xff]
    %v690 = vld [vmem:[#allocation8 + $0x58] sm:$0xff]
    %v691 = vld [vmem:[#allocation8 + $0x60] sm:$0xff]
    %v692 = vld [vmem:[#allocation8 + $0x68] sm:$0xff]
    %v693 = vld [vmem:[#allocation8 + $0x70] sm:$0xff]
    %v694 = vld [vmem:[#allocation8 + $0x78] sm:$0xff]
    %v695 = vld [vmem:[#allocation8 + $0x80] sm:$0xff]
    %v696 = vld [vmem:[#allocation8 + $0x88] sm:$0xff]
    %v697 = vld [vmem:[#allocation8 + $0x90] sm:$0xff]
    %v698 = vld [vmem:[#allocation8 + $0x98] sm:$0xff]
    %v699 = vld [vmem:[#allocation8 + $0xa0] sm:$0xff]
    %v700 = vld [vmem:[#allocation8 + $0xa8] sm:$0xff]
    %v701 = vld [vmem:[#allocation8 + $0xb0] sm:$0xff]
    %v702 = vld [vmem:[#allocation8 + $0xb8] sm:$0xff]
    %v703 = vld [vmem:[#allocation8 + $0xc0] sm:$0xff]
    %v704 = vld [vmem:[#allocation8 + $0xc8] sm:$0xff]
    %v705 = vld [vmem:[#allocation8 + $0xd0] sm:$0xff]
    %v706 = vld [vmem:[#allocation8 + $0xd8] sm:$0xff]
    %v707 = vld [vmem:[#allocation8 + $0xe0] sm:$0xff]
    %v708 = vld [vmem:[#allocation8 + $0xe8] sm:$0xff]
    %v709 = vld [vmem:[#allocation8 + $0xf0] sm:$0xff]
    %v710 = vld [vmem:[#allocation8 + $0xf8] sm:$0xff]
    %v743 = vunpack.c.l.b16 %v679
    %v744 = vunpack.c.h.b16 %v679
    %v745 = vunpack.c.l.b16 %v680
    %v746 = vunpack.c.h.b16 %v680
    %v747 = vunpack.c.l.b16 %v681
    %v748 = vunpack.c.h.b16 %v681
    %v749 = vunpack.c.l.b16 %v682
    %v750 = vunpack.c.h.b16 %v682
    %v751 = vunpack.c.l.b16 %v683
    %v752 = vunpack.c.h.b16 %v683
    %v753 = vunpack.c.l.b16 %v684
    %v754 = vunpack.c.h.b16 %v684
    %v755 = vunpack.c.l.b16 %v685
    %v756 = vunpack.c.h.b16 %v685
    %v757 = vunpack.c.l.b16 %v686
    %v758 = vunpack.c.h.b16 %v686
    %v759 = vunpack.c.l.b16 %v687
    %v760 = vunpack.c.h.b16 %v687
    %v761 = vunpack.c.l.b16 %v688
    %v762 = vunpack.c.h.b16 %v688
    %v763 = vunpack.c.l.b16 %v689
    %v764 = vunpack.c.h.b16 %v689
    %v765 = vunpack.c.l.b16 %v690
    %v766 = vunpack.c.h.b16 %v690
    %v767 = vunpack.c.l.b16 %v691
    %v768 = vunpack.c.h.b16 %v691
    %v769 = vunpack.c.l.b16 %v692
    %v770 = vunpack.c.h.b16 %v692
    %v771 = vunpack.c.l.b16 %v693
    %v772 = vunpack.c.h.b16 %v693
    %v773 = vunpack.c.l.b16 %v694
    %v774 = vunpack.c.h.b16 %v694
    %v775 = vunpack.c.l.b16 %v695
    %v776 = vunpack.c.h.b16 %v695
    %v777 = vunpack.c.l.b16 %v696
    %v778 = vunpack.c.h.b16 %v696
    %v779 = vunpack.c.l.b16 %v697
    %v780 = vunpack.c.h.b16 %v697
    %v781 = vunpack.c.l.b16 %v698
    %v782 = vunpack.c.h.b16 %v698
    %v783 = vunpack.c.l.b16 %v699
    %v784 = vunpack.c.h.b16 %v699
    %v785 = vunpack.c.l.b16 %v700
    %v786 = vunpack.c.h.b16 %v700
    %v787 = vunpack.c.l.b16 %v701
    %v788 = vunpack.c.h.b16 %v701
    %v789 = vunpack.c.l.b16 %v702
    %v790 = vunpack.c.h.b16 %v702
    %v791 = vunpack.c.l.b16 %v703
    %v792 = vunpack.c.h.b16 %v703
    %v793 = vunpack.c.l.b16 %v704
    %v794 = vunpack.c.h.b16 %v704
    %v795 = vunpack.c.l.b16 %v705
    %v796 = vunpack.c.h.b16 %v705
    %v797 = vunpack.c.l.b16 %v706
    %v798 = vunpack.c.h.b16 %v706
    %v799 = vunpack.c.l.b16 %v707
    %v800 = vunpack.c.h.b16 %v707
    %v801 = vunpack.c.l.b16 %v708
    %v802 = vunpack.c.h.b16 %v708
    %v803 = vunpack.c.l.b16 %v709
    %v804 = vunpack.c.h.b16 %v709
    %v805 = vunpack.c.l.b16 %v710
    %v806 = vunpack.c.h.b16 %v710
    %v807 = vpack.c.b16 %v745, %v743
    %v808 = vpack.c.b16 %v746, %v744
    %v809 = vpack.c.b16 %v749, %v747
    %v810 = vpack.c.b16 %v750, %v748
    %v811 = vpack.c.b16 %v753, %v751
    %v812 = vpack.c.b16 %v754, %v752
    %v813 = vpack.c.b16 %v757, %v755
    %v814 = vpack.c.b16 %v758, %v756
    %v815 = vpack.c.b16 %v761, %v759
    %v816 = vpack.c.b16 %v762, %v760
    %v817 = vpack.c.b16 %v765, %v763
    %v818 = vpack.c.b16 %v766, %v764
    %v819 = vpack.c.b16 %v769, %v767
    %v820 = vpack.c.b16 %v770, %v768
    %v821 = vpack.c.b16 %v773, %v771
    %v822 = vpack.c.b16 %v774, %v772
    %v823 = vpack.c.b16 %v777, %v775
    %v824 = vpack.c.b16 %v778, %v776
    %v825 = vpack.c.b16 %v781, %v779
    %v826 = vpack.c.b16 %v782, %v780
    %v827 = vpack.c.b16 %v785, %v783
    %v828 = vpack.c.b16 %v786, %v784
    %v829 = vpack.c.b16 %v789, %v787
    %v830 = vpack.c.b16 %v790, %v788
    %v831 = vpack.c.b16 %v793, %v791
    %v832 = vpack.c.b16 %v794, %v792
    %v833 = vpack.c.b16 %v797, %v795
    %v834 = vpack.c.b16 %v798, %v796
    %v835 = vpack.c.b16 %v801, %v799
    %v836 = vpack.c.b16 %v802, %v800
    %v837 = vpack.c.b16 %v805, %v803
    %v838 = vpack.c.b16 %v806, %v804
    %871 = vmatprep.subr.bf16.mxu0 %v808
    %872 = vmatpush1.bf16.msra.mxu0 %v807
    %873 = vmatprep.subr.bf16.mxu0 %v810
    %874 = vmatpush1.bf16.msra.mxu0 %v809
    %875 = vmatprep.subr.bf16.mxu0 %v812
    %876 = vmatpush1.bf16.msra.mxu0 %v811
    %877 = vmatprep.subr.bf16.mxu0 %v814
    %878 = vmatpush1.bf16.msra.mxu0 %v813
    %879 = vmatprep.subr.bf16.mxu0 %v816
    %880 = vmatpush1.bf16.msra.mxu0 %v815
    %881 = vmatprep.subr.bf16.mxu0 %v818
    %882 = vmatpush1.bf16.msra.mxu0 %v817
    %883 = vmatprep.subr.bf16.mxu0 %v820
    %884 = vmatpush1.bf16.msra.mxu0 %v819
    %885 = vmatprep.subr.bf16.mxu0 %v822
    %886 = vmatpush1.bf16.msra.mxu0 %v821
    %887 = vmatprep.subr.bf16.mxu0 %v824
    %888 = vmatpush1.bf16.msra.mxu0 %v823
    %889 = vmatprep.subr.bf16.mxu0 %v826
    %890 = vmatpush1.bf16.msra.mxu0 %v825
    %891 = vmatprep.subr.bf16.mxu0 %v828
    %892 = vmatpush1.bf16.msra.mxu0 %v827
    %893 = vmatprep.subr.bf16.mxu0 %v830
    %894 = vmatpush1.bf16.msra.mxu0 %v829
    %895 = vmatprep.subr.bf16.mxu0 %v832
    %896 = vmatpush1.bf16.msra.mxu0 %v831
    %897 = vmatprep.subr.bf16.mxu0 %v834
    %898 = vmatpush1.bf16.msra.mxu0 %v833
    %899 = vmatprep.subr.bf16.mxu0 %v836
    %900 = vmatpush1.bf16.msra.mxu0 %v835
    %901 = vmatprep.subr.bf16.mxu0 %v838
    %902 = vmatpush1.bf16.msra.mxu0 %v837
    %903 = vmatprep.mubr.bf16.mxu0 %v678
    %904 = vmatmul.mubr.bf16.gmra.mrb[0].mxu0 %v677
    %v905 = vpop.f32.mrb[0].mxu0
    %v906 = vadd.f32 0.0, %v905
    %v907 = vpop.f32.mrb[0].mxu0
    %v908 = vadd.f32 0.0, %v907
    %v909 = vpop.f32.mrb[0].mxu0
    %v910 = vadd.f32 0.0, %v909
    %v911 = vpop.f32.mrb[0].mxu0
    %v912 = vadd.f32 0.0, %v911
    %913 = vdwg.mxu0
    %v914 = vadd.f32 %v906, %v910
    %v915 = vrot.slane %v914, 4
    %v916 = vadd.f32 %v914, %v915
    %v917 = vrot.slane %v916, 2
    %v918 = vadd.f32 %v916, %v917
    %v919 = vrot.slane %v918, 1
    %v920 = vadd.f32 %v918, %v919
    %v921 = vadd.f32 %v908, %v912
    %v922 = vrot.slane %v921, 4
    %v923 = vadd.f32 %v921, %v922
    %v924 = vrot.slane %v923, 2
    %v925 = vadd.f32 %v923, %v924
    %v926 = vrot.slane %v925, 1
    %v927 = vadd.f32 %v925, %v926
    %v928 = vmul.f32 %v906, %v906
    %v929 = vmul.f32 %v908, %v908
    %v930 = vmul.f32 %v910, %v910
    %v931 = vmul.f32 %v912, %v912
    %v932 = vadd.f32 %v928, %v930
    %v933 = vrot.slane %v932, 4
    %v934 = vadd.f32 %v932, %v933
    %v935 = vrot.slane %v934, 2
    %v936 = vadd.f32 %v934, %v935
    %v937 = vrot.slane %v936, 1
    %v938 = vadd.f32 %v936, %v937
    %v939 = vadd.f32 %v929, %v931
    %v940 = vrot.slane %v939, 4
    %v941 = vadd.f32 %v939, %v940
    %v942 = vrot.slane %v941, 2
    %v943 = vadd.f32 %v941, %v942
    %v944 = vrot.slane %v943, 1
    %v945 = vadd.f32 %v943, %v944
    %v946 = vmul.f32 %v920, 0.0625
    %v947 = vmul.f32 %v927, 0.0625
    %v948 = vmul.f32 %v938, 0.0625
    %v949 = vmul.f32 %v945, 0.0625
    %v950 = vmul.f32 %v946, %v946
    %v951 = vmul.f32 %v947, %v947
    %v952 = vsub.f32 %v948, %v950
    %v953 = vsub.f32 %v949, %v951
    %v954 = vmax.f32 %v952, 0.0
    %v955 = vmax.f32 %v953, 0.0
    %v956 = vld [vmem:[%s10] sm:$0x3]
    %v957 = vadd.f32 %v954, 0.8
    %v958 = vadd.f32 %v955, 0.8
    %v959 = vrsqrt.pop %v957
    %v960 = vrsqrt.pop %v958
    %v963 = vcombine.low %v959, %v960
    %v965 = vunpack.c.l.s4 1966171168
    %v966 = vunpack.c.0.s8 %v965
    %v967 = vlaneseq
    %v968 = vshrl.u32 %v967, 7
    %v969 = vsub.s32 %v966, %v968
    %v970 = vrot.slane %v963, %v969
    %v972 = vunpack.c.l.s4 1966171168
    %v973 = vunpack.c.0.s8 %v972
    %v974 = vlaneseq
    %v975 = vshrl.u32 %v974, 7
    %v976 = vsub.s32 %v973, %v975
    %v977 = vrot.slane %v970, %v976
    %v979 = vmul.f32 %v956, %v977
    %v980 = vld [vmem:[%s11] sm:$0x3]
    %v982 = vlaneseq
    %v983 = vshrl.u32 %v982, 7
    %v984 = vsub.s32 0, %v983
    %v985 = vrot.slane %v979, %v984
    %v986 = vlaneseq
    %v987 = vshrl.u32 %v986, 7
    %v988 = vsub.s32 1, %v987
    %v989 = vrot.slane %v979, %v988
    %v992 = vmul.f32 %v946, %v985
    %v993 = vmul.f32 %v947, %v989
    %v996 = vcombine.low %v992, %v993
    %v998 = vunpack.c.l.s4 1966171168
    %v999 = vunpack.c.0.s8 %v998
    %v1000 = vlaneseq
    %v1001 = vshrl.u32 %v1000, 7
    %v1002 = vsub.s32 %v999, %v1001
    %v1003 = vrot.slane %v996, %v1002
    %v1005 = vunpack.c.l.s4 1966171168
    %v1006 = vunpack.c.0.s8 %v1005
    %v1007 = vlaneseq
    %v1008 = vshrl.u32 %v1007, 7
    %v1009 = vsub.s32 %v1006, %v1008
    %v1010 = vrot.slane %v1003, %v1009
    %v1012 = vsub.f32 %v980, %v1010
    %v1013 = vmul.f32 %v906, %v985
    %v1014 = vmul.f32 %v908, %v989
    %v1015 = vmul.f32 %v910, %v985
    %v1016 = vmul.f32 %v912, %v989
    %v1018 = vlaneseq
    %v1019 = vshrl.u32 %v1018, 7
    %v1020 = vsub.s32 0, %v1019
    %v1021 = vrot.slane %v1012, %v1020
    %v1022 = vlaneseq
    %v1023 = vshrl.u32 %v1022, 7
    %v1024 = vsub.s32 1, %v1023
    %v1025 = vrot.slane %v1012, %v1024
    %v1028 = vadd.f32 %v1013, %v1021
    %v1029 = vadd.f32 %v1014, %v1025
    %v1030 = vadd.f32 %v1015, %v1021
    %v1031 = vadd.f32 %v1016, %v1025
    %v1032 = vmul.f32 %v1028, 0.2
    %v1033 = vmul.f32 %v1029, 0.2
    %v1034 = vmul.f32 %v1030, 0.2
    %v1035 = vmul.f32 %v1031, 0.2
    %v1036 = vmax.f32 %v1028, %v1032
    %v1037 = vmax.f32 %v1029, %v1033
    %v1038 = vmax.f32 %v1030, %v1034
    %v1039 = vmax.f32 %v1031, %v1035
    %v1040 = vld [vmem:[%s12] sm:$0x3]
    %v1042 = vlaneseq
    %v1043 = vshrl.u32 %v1042, 7
    %v1044 = vsub.s32 0, %v1043
    %v1045 = vrot.slane %v1040, %v1044
    %v1046 = vlaneseq
    %v1047 = vshrl.u32 %v1046, 7
    %v1048 = vsub.s32 1, %v1047
    %v1049 = vrot.slane %v1040, %v1048
    %v1052 = vmul.f32 %v1036, %v1045
    %v1053 = vmul.f32 %v1037, %v1049
    %v1054 = vmul.f32 %v1038, %v1045
    %v1055 = vmul.f32 %v1039, %v1049
    %v1056 = vadd.f32 %v1052, %v1053
    %1057 = vadd.xlane.f32.xlu0 %v1056
    %v1058 = vpop.xlane.xlu0 %1057
    %v1059 = vadd.f32 %v1054, %v1055
    %1060 = vadd.xlane.f32.xlu0 %v1059
    %v1061 = vpop.xlane.xlu0 %1060
    %v1062 = vsub.f32 0.0, %v1058
    %v1063 = vsub.f32 0.0, %v1061
    %v1064 = vmul.f32 %v1062, 1.442695
    %v1065 = vpow.pop %v1064
    %v1066 = vmul.f32 %v1063, 1.442695
    %v1067 = vpow.pop %v1066
    %v1068 = vadd.f32 %v1065, 1.0
    %v1069 = vadd.f32 %v1067, 1.0
    %v1070 = vrcp.pop %v1068
    %v1071 = vmul.f32 1.0, %v1070
    %v1072 = vrcp.pop %v1069
    %v1073 = vmul.f32 1.0, %v1072
    %v1076 = vlaneseq
    %v1077 = vand.u32 %v1076, 127
    %v1078 = vlaneseq
    %v1079 = vshrl.u32 %v1078, 7
    %v1080 = vsub.s32 %v1077, %v1079
    %v1081 = vrot.slane %v1071, %v1080
    %v1082 = vadd.s32 %v1077, 4294967288
    %v1083 = vlaneseq
    %v1084 = vshrl.u32 %v1083, 7
    %v1085 = vsub.s32 %v1082, %v1084
    %v1086 = vrot.slane %v1073, %v1085
    %vm1087 = vcmask 130112
    %v1088 = vsel %vm1087, %v1086, %v1081
    %vm1090 = vcmask 122880
    %1091 = vst.msk [vmem:[#allocation10] sm:$0x1] %vm1090, %v1088
    // Predicated region
    $region70: #{tpu_custom_call.1} parent=1 // pred_check
      _
    $region71: #{tpu_custom_call.1} parent=1 // pred_check_branch
      %1093 = sbr.rel (0) target = $region73
    $region72: #{tpu_custom_call.1} parent=1 // pred_region
      %s1095 = ssub.s32 16, 16
      %1096 = vsyncadd [#allocation4], %s1095
      %s1098 = sshll.u32 [#allocation10], 4
      %s1099 = int_to_ptr.vmem [resolvable:$true] %s1098
      %1101 = dma.vmem_to_hbm [thread:$0]  %s1099, 16, %s13, [#allocation4]
    $region73: #{tpu_custom_call.1} parent=1 // pred_fallthru
      _
    // Predicated region
    $region74: #{tpu_custom_call.1} parent=1 // pred_check
      _
    $region75: #{tpu_custom_call.1} parent=1 // pred_check_branch
      %1103 = sbr.rel (0) target = $region77
    $region76: #{tpu_custom_call.1} parent=1 // pred_region
      %1104 = dma.done [#allocation4], 16
    $region77: #{tpu_custom_call.1} parent=1 // pred_fallthru
      _
    %1105 = vsyncpa [#allocation3], 1
    %1106 = vsyncpa [#allocation6], 1
    %1107 = vsyncpa [#allocation9], 1
    %1108 = vsyncpa [#allocation4], 1

</llo_original>
